<compile_context>
chip_gen: v7x
topology: tpu7x:2x2x1
jax: 0.10.0
libtpu: 0.0.40
codegen_flags: <defaults>
</compile_context>

<pallas_src>
import math
import jax
import jax.numpy as jnp
from jax.experimental import pallas as pl
from jax.experimental.pallas import tpu as pltpu

# ----------------------------- config (small, consistent with the module) ----
BATCH      = 8
N_NUM      = 6                   # info['n_num_features']
N_CAT      = 2                   # info['n_cat_features']
CATEGORIES = [3, 5]              # cardinality of each categorical column
D_EMB      = 8                   # config['model']['d_embedding']
D_LAYERS   = [32, 32]            # config['model']['d_layers']
TOPIC_NUM  = 4
OUT_DIM    = 2
D_HID      = D_LAYERS[-1]        # 32
ENC_IN     = N_NUM + N_CAT * D_EMB   # 22
CAT_PAD    = 8                   # one-hot width per categorical column (>= max card.)
LANE       = 128                 # lane width / minimum batch pad

# packed input rows: [0:6 numeric | 6:8 zero | 8:16 one-hot c0 | 16:24 one-hot c1 | 24:32 zero]
IN_ROWS    = 32

# ----------------------------- packed weight slab layout (transposed) --------
# One fp32 slab [SLAB_ROWS, 32]; every block stores W^T (out-major), 8-row aligned.
R_W0  = 0                         # stacked first layer  [32,32]: cols 0:6 W0num^T,
                                  #   cols 8:16 (E0@W0e0)^T, cols 16:24 (E1@W0e1)^T
R_W1  = R_W0 + 32                 # enc W1^T             [32,32]
R_RH  = R_W1 + 32                 # [reduce W0^T ; head W^T]  [64,32]
R_R1  = R_RH + 64                 # reduce W1^T          [32,32]
R_R2  = R_R1 + 32                 # reduce W2^T          [32,32]
R_R3  = R_R2 + 32                 # reduce W3^T          [8,32]  (4 real rows)
R_B   = R_R3 + 8                  # bias columns         [64,32]
SLAB_ROWS = R_B + 64              # 264

# bias block columns
BC_ENC0, BC_ENC1, BC_R0H, BC_R1, BC_R2, BC_R3 = 0, 1, 2, 3, 4, 5

# output slab rows (transposed): h | softmax | head
R_OUT_H, R_OUT_SOFT, R_OUT_HEAD, OUT_ROWS = 0, 32, 40, 48


def _gelu_tanh(v):
    # tanh-approximation GELU (EUP tanh); deviates from torch's exact erf GELU by <~1e-3
    c = math.sqrt(2.0 / math.pi)
    return 0.5 * v * (1.0 + jnp.tanh(c * (v + 0.044715 * v * v * v)))


# ----------------------------- fused forward kernel --------------------------
def fused_forward_kernel(x_ref, w_ref, out_ref):
    f32 = jnp.float32
    tb = x_ref.shape[1]
    x = x_ref[...]                                             # [32, TB]

    def bias(row0, nrows, col):                                # [nrows, 1] -> lane-broadcast
        return w_ref[row0:row0 + nrows, col:col + 1]

    # ---- encoder: one stacked dot (numeric + folded embeddings) -> ReLU, then L1 ----
    h = jnp.dot(w_ref[R_W0:R_W0 + 32, :], x,
                preferred_element_type=f32) + bias(R_B, 32, BC_ENC0)
    h = jnp.maximum(h, 0.0)
    h = jnp.dot(w_ref[R_W1:R_W1 + 32, :], h,
                preferred_element_type=f32) + bias(R_B, 32, BC_ENC1)
    h = jnp.maximum(h, 0.0)                                    # features, [32, TB]

    # ---- merged (reduce-W0 | head) dot: both consume h -----------------------------
    rh = jnp.dot(w_ref[R_RH:R_RH + 64, :], h,
                 preferred_element_type=f32) + bias(R_B, 64, BC_R0H)   # [64, TB]
    r = _gelu_tanh(rh[0:32, :])                                # reduce branch
    head = rh[32:40, :]                                        # head logits (rows 0:2 real)

    # ---- reduce: two more (Linear -> GELU), then Linear(topic_num) -----------------
    r = _gelu_tanh(jnp.dot(w_ref[R_R1:R_R1 + 32, :], r,
                           preferred_element_type=f32) + bias(R_B, 32, BC_R1))
    r = _gelu_tanh(jnp.dot(w_ref[R_R2:R_R2 + 32, :], r,
                           preferred_element_type=f32) + bias(R_B, 32, BC_R2))
    r3 = jnp.dot(w_ref[R_R3:R_R3 + 8, :], r,
                 preferred_element_type=f32) + bias(R_B, 8, BC_R3)     # [8, TB]

    # ---- softmax over the topic axis (sublanes 0:TOPIC_NUM) ------------------------
    sub = jax.lax.broadcasted_iota(jnp.int32, (8, tb), 0)
    r3 = jnp.where(sub < TOPIC_NUM, r3, f32(-1e30))
    m = jnp.max(r3, axis=0, keepdims=True)
    e = jnp.exp(r3 - m)
    soft = e * pl.reciprocal(jnp.sum(e, axis=0, keepdims=True), approx=False)

    # ---- lane-dense output slab: three unmasked sublane-aligned stores -------------
    out_ref[R_OUT_H:R_OUT_H + 32, :] = h
    out_ref[R_OUT_SOFT:R_OUT_SOFT + 8, :] = soft
    out_ref[R_OUT_HEAD:R_OUT_HEAD + 8, :] = head


def _pick_tile(b_pad):
    # lane-dense tiles; keep >=2 tiles when possible so v7x's 2nd TensorCore is used.
    if b_pad >= 512 and b_pad % 256 == 0:
        return 256
    return 128


def fused_forward(x_packed, w_slab):
    rows_in, b_pad = x_packed.shape
    tb = _pick_tile(b_pad)
    return pl.pallas_call(
        fused_forward_kernel,
        grid=(b_pad // tb,),
        in_specs=[
            pl.BlockSpec((rows_in, tb), lambda i: (0, i)),
            pl.BlockSpec(w_slab.shape, lambda i: (0, 0)),      # weights resident
        ],
        out_specs=pl.BlockSpec((OUT_ROWS, tb), lambda i: (0, i)),
        out_shape=jax.ShapeDtypeStruct((OUT_ROWS, b_pad), jnp.float32),
        compiler_params=pltpu.CompilerParams(
            dimension_semantics=("parallel",)),                # batch tiles across TCs
    )(x_packed, w_slab)


# ----------------------------- parameter init (deterministic) ----------------
def init_params(key):
    ks = iter(jax.random.split(key, 64))

    def linear(fan_in, fan_out):
        w = jax.random.normal(next(ks), (fan_in, fan_out), jnp.float32) * (1.0 / math.sqrt(fan_in))
        b = jax.random.normal(next(ks), (1, fan_out), jnp.float32) * 0.01
        return w, b

    params = {}
    params["emb"] = [
        jax.random.normal(next(ks), (c, D_EMB), jnp.float32) * 0.1 for c in CATEGORIES
    ]
    params["enc"] = [linear(ENC_IN, D_LAYERS[0]), linear(D_LAYERS[0], D_LAYERS[1])]
    d = D_HID
    params["reduce"] = [linear(d, d), linear(d, d), linear(d, d), linear(d, TOPIC_NUM)]
    params["head"] = linear(d, OUT_DIM)
    params["weight_"] = jnp.float32(0.5)      # nn.Parameter(torch.tensor(0.5))
    # topic / cluster centers (unused in forward, kept for parity)
    params["topic"] = jax.random.normal(next(ks), (TOPIC_NUM, d), jnp.float32) * 0.1
    return params


def pack_params(params):
    """Host-side one-time packing of all (transposed) weights into one [264,32] slab."""
    f32 = jnp.float32
    ew0, eb0 = params["enc"][0]           # [22,32], [1,32]
    ew1, eb1 = params["enc"][1]           # [32,32], [1,32]
    red = params["reduce"]
    hw, hb = params["head"]               # [32,2], [1,2]
    E0, E1 = params["emb"]                # [3,8], [5,8]

    # fold embedding tables into the first layer
    W0n = ew0[:N_NUM]                                   # [6,32]
    M0 = E0 @ ew0[N_NUM:N_NUM + D_EMB]                  # [3,32]
    M1 = E1 @ ew0[N_NUM + D_EMB:]                       # [5,32]

    w0stack = jnp.zeros((D_HID, 32), f32)
    w0stack = w0stack.at[:, 0:N_NUM].set(W0n.T)
    w0stack = w0stack.at[:, 8:8 + CATEGORIES[0]].set(M0.T)
    w0stack = w0stack.at[:, 16:16 + CATEGORIES[1]].set(M1.T)

    w1t = ew1.T

    rh = jnp.zeros((2 * D_HID, D_HID), f32)
    rh = rh.at[:D_HID, :].set(red[0][0].T)              # reduce W0^T
    rh = rh.at[D_HID:D_HID + OUT_DIM, :].set(hw.T)      # head W^T

    r1t = red[1][0].T
    r2t = red[2][0].T
    r3t = jnp.zeros((8, D_HID), f32).at[:TOPIC_NUM, :].set(red[3][0].T)

    bias = jnp.zeros((2 * D_HID, D_HID), f32)
    bias = bias.at[:D_HID, BC_ENC0].set(eb0[0])
    bias = bias.at[:D_HID, BC_ENC1].set(eb1[0])
    bias = bias.at[:D_HID, BC_R0H].set(red[0][1][0])
    bias = bias.at[D_HID:D_HID + OUT_DIM, BC_R0H].set(hb[0])
    bias = bias.at[:D_HID, BC_R1].set(red[1][1][0])
    bias = bias.at[:D_HID, BC_R2].set(red[2][1][0])
    bias = bias.at[:TOPIC_NUM, BC_R3].set(red[3][1][0])

    slab = jnp.concatenate([w0stack, w1t, rh, r1t, r2t, r3t, bias], axis=0)
    assert slab.shape == (SLAB_ROWS, D_HID)
    return slab


# ----------------------------- jitted forward --------------------------------
@jax.jit
def model_forward(packed, weight_, inputs_n, inputs_c):
    f32 = jnp.float32
    B = inputs_n.shape[0]
    b_pad = max(LANE, ((B + LANE - 1) // LANE) * LANE)

    # single packed, transposed input stream: numeric rows + one-hot category rows
    xn_t = inputs_n.astype(f32).T                                    # [6, B]
    oh0 = jax.nn.one_hot(inputs_c[:, 0], CAT_PAD, dtype=f32).T       # [8, B]
    oh1 = jax.nn.one_hot(inputs_c[:, 1], CAT_PAD, dtype=f32).T       # [8, B]
    x = jnp.zeros((IN_ROWS, b_pad), f32)
    x = x.at[0:N_NUM, :B].set(xn_t)
    x = x.at[8:16, :B].set(oh0)
    x = x.at[16:24, :B].set(oh1)

    out = fused_forward(x, packed)                                   # [48, b_pad]
    feats = out[R_OUT_H:R_OUT_H + D_HID, :B].T
    r_soft = out[R_OUT_SOFT:R_OUT_SOFT + TOPIC_NUM, :B].T
    head_out = out[R_OUT_HEAD:R_OUT_HEAD + OUT_DIM, :B].T
    gate = jax.nn.sigmoid(weight_) + 0.01                            # scalar glue
    return head_out, r_soft, feats, gate                             # model_type == 'MLP_ot'


# ----------------------------- pure-JAX reference -----------------------------
def reference_forward(params, inputs_n, inputs_c):
    # matches the torch module (exact erf GELU, eval-mode dropout = identity)
    embs = [params["emb"][i][inputs_c[:, i]] for i in range(N_CAT)]
    x = jnp.concatenate([inputs_n] + embs, axis=1).astype(jnp.float32)
    h = x
    for w, b in params["enc"]:
        h = jnp.maximum(h @ w + b, 0.0)
    r = h
    for w, b in params["reduce"][:3]:
        r = jax.nn.gelu(r @ w + b, approximate=False)
    w, b = params["reduce"][3]
    r = r @ w + b
    r_soft = jax.nn.softmax(r, axis=1)
    head = h @ params["head"][0] + params["head"][1]
    gate = jax.nn.sigmoid(params["weight_"]) + 0.01
    return head, r_soft, h, gate


def _check(B, params, packed, key):
    kn, kc = jax.random.split(key)
    inputs_n = jax.random.normal(kn, (B, N_NUM), jnp.float32)
    inputs_c = jnp.stack(
        [jax.random.randint(jax.random.fold_in(kc, i), (B,), 0, CATEGORIES[i])
         for i in range(N_CAT)], axis=1).astype(jnp.int32)

    head_out, r_soft, feats, gate = model_forward(packed, params["weight_"],
                                                  inputs_n, inputs_c)
    jax.block_until_ready((head_out, r_soft, feats, gate))

    ref_head, ref_soft, ref_feats, ref_gate = reference_forward(params, inputs_n, inputs_c)

    assert head_out.shape == (B, OUT_DIM)
    assert r_soft.shape == (B, TOPIC_NUM)
    assert feats.shape == (B, D_HID)
    assert jnp.allclose(jnp.sum(r_soft, axis=1), 1.0, atol=1e-5)
    assert jnp.allclose(feats, ref_feats, atol=3e-3, rtol=3e-3)
    assert jnp.allclose(head_out, ref_head, atol=3e-3, rtol=3e-3)
    # kernel uses tanh-GELU; reference uses torch-default exact erf GELU (dev <~1e-3)
    assert jnp.allclose(r_soft, ref_soft, atol=3e-3, rtol=3e-3)
    assert jnp.allclose(gate, ref_gate, atol=1e-6)


# ----------------------------- main ------------------------------------------
if __name__ == "__main__":
    key = jax.random.PRNGKey(0)
    kp, kd = jax.random.split(key)

    params = init_params(kp)
    packed = pack_params(params)                   # one-time host-side packing

    _check(BATCH, params, packed, kd)              # tiny batch (single tile)
    _check(256, params, packed, jax.random.fold_in(kd, 1))   # multi-tile / parallel path

    print("KERNEL_OK")
</pallas_src>

<mosaic_0001>
module attributes {stable_mosaic.version = 11 : i64} {
  func.func @fused_forward_kernel(%arg0: i32, %arg1: memref<32x128xf32, #tpu.memory_space<vmem>>, %arg2: memref<264x32xf32, #tpu.memory_space<vmem>>, %arg3: memref<48x128xf32, #tpu.memory_space<vmem>>) attributes {dimension_semantics = [#tpu.dimension_semantics<parallel>], iteration_bounds = array<i64: 1>, scalar_prefetch = 0 : i64, scratch_operands = 0 : i64, tpu.core_type = #tpu.core_type<tc>, window_params = [{transform_indices = @transform_0, window_bounds = array<i64: 32, 128>}, {pipeline_mode = #tpu.pipeline_mode<synchronous>, transform_indices = @transform_1, window_bounds = array<i64: 264, 32>}, {transform_indices = @transform_2, window_bounds = array<i64: 48, 128>}]} {
    %c0 = arith.constant 0 : index
    %c0_0 = arith.constant 0 : index
    %0 = vector.load %arg1[%c0, %c0_0] : memref<32x128xf32, #tpu.memory_space<vmem>>, vector<32x128xf32>
    %c0_1 = arith.constant 0 : index
    %c0_2 = arith.constant 0 : index
    %1 = vector.load %arg2[%c0_1, %c0_2] : memref<264x32xf32, #tpu.memory_space<vmem>>, vector<32x32xf32>
    %cst = arith.constant dense<0.000000e+00> : vector<32x128xf32>
    %2 = tpu.matmul %1, %0, %cst {dimension_numbers = #tpu.dot_dimension_numbers<[1], [0], [0], [1], [0, 0, 1, 1], [], []>} : vector<32x32xf32>, vector<32x128xf32>, vector<32x128xf32> -> vector<32x128xf32>
    %c200 = arith.constant 200 : index
    %c0_3 = arith.constant 0 : index
    %3 = vector.load %arg2[%c200, %c0_3] : memref<264x32xf32, #tpu.memory_space<vmem>>, vector<32x1xf32>
    %4 = vector.broadcast %3 : vector<32x1xf32> to vector<32x128xf32>
    %5 = arith.addf %2, %4 : vector<32x128xf32>
    %cst_4 = arith.constant 0.000000e+00 : f32
    %6 = vector.broadcast %cst_4 : f32 to vector<32x128xf32>
    %7 = arith.maximumf %5, %6 : vector<32x128xf32>
    %c32 = arith.constant 32 : index
    %c0_5 = arith.constant 0 : index
    %8 = vector.load %arg2[%c32, %c0_5] : memref<264x32xf32, #tpu.memory_space<vmem>>, vector<32x32xf32>
    %cst_6 = arith.constant dense<0.000000e+00> : vector<32x128xf32>
    %9 = tpu.matmul %8, %7, %cst_6 {dimension_numbers = #tpu.dot_dimension_numbers<[1], [0], [0], [1], [0, 0, 1, 1], [], []>} : vector<32x32xf32>, vector<32x128xf32>, vector<32x128xf32> -> vector<32x128xf32>
    %c200_7 = arith.constant 200 : index
    %c1 = arith.constant 1 : index
    %10 = vector.load %arg2[%c200_7, %c1] : memref<264x32xf32, #tpu.memory_space<vmem>>, vector<32x1xf32>
    %11 = vector.broadcast %10 : vector<32x1xf32> to vector<32x128xf32>
    %12 = arith.addf %9, %11 : vector<32x128xf32>
    %cst_8 = arith.constant 0.000000e+00 : f32
    %13 = vector.broadcast %cst_8 : f32 to vector<32x128xf32>
    %14 = arith.maximumf %12, %13 : vector<32x128xf32>
    %c64 = arith.constant 64 : index
    %c0_9 = arith.constant 0 : index
    %15 = vector.load %arg2[%c64, %c0_9] : memref<264x32xf32, #tpu.memory_space<vmem>>, vector<64x32xf32>
    %cst_10 = arith.constant dense<0.000000e+00> : vector<64x128xf32>
    %16 = tpu.matmul %15, %14, %cst_10 {dimension_numbers = #tpu.dot_dimension_numbers<[1], [0], [0], [1], [0, 0, 1, 1], [], []>} : vector<64x32xf32>, vector<32x128xf32>, vector<64x128xf32> -> vector<64x128xf32>
    %c200_11 = arith.constant 200 : index
    %c2 = arith.constant 2 : index
    %17 = vector.load %arg2[%c200_11, %c2] : memref<264x32xf32, #tpu.memory_space<vmem>>, vector<64x1xf32>
    %18 = vector.broadcast %17 : vector<64x1xf32> to vector<64x128xf32>
    %19 = arith.addf %16, %18 : vector<64x128xf32>
    %20 = vector.extract_strided_slice %19 {offsets = [0, 0], sizes = [32, 128], strides = [1, 1]} : vector<64x128xf32> to vector<32x128xf32>
    %cst_12 = arith.constant 5.000000e-01 : f32
    %21 = vector.broadcast %cst_12 : f32 to vector<32x128xf32>
    %22 = arith.mulf %21, %20 : vector<32x128xf32>
    %cst_13 = arith.constant 4.471500e-02 : f32
    %23 = vector.broadcast %cst_13 : f32 to vector<32x128xf32>
    %24 = arith.mulf %23, %20 : vector<32x128xf32>
    %25 = arith.mulf %24, %20 : vector<32x128xf32>
    %26 = arith.mulf %25, %20 : vector<32x128xf32>
    %27 = arith.addf %20, %26 : vector<32x128xf32>
    %cst_14 = arith.constant 0.797884583 : f32
    %28 = vector.broadcast %cst_14 : f32 to vector<32x128xf32>
    %29 = arith.mulf %28, %27 : vector<32x128xf32>
    %30 = math.tanh %29 : vector<32x128xf32>
    %cst_15 = arith.constant 1.000000e+00 : f32
    %31 = vector.broadcast %cst_15 : f32 to vector<32x128xf32>
    %32 = arith.addf %31, %30 : vector<32x128xf32>
    %33 = arith.mulf %22, %32 : vector<32x128xf32>
    %34 = vector.extract_strided_slice %19 {offsets = [32, 0], sizes = [8, 128], strides = [1, 1]} : vector<64x128xf32> to vector<8x128xf32>
    %c128 = arith.constant 128 : index
    %c0_16 = arith.constant 0 : index
    %35 = vector.load %arg2[%c128, %c0_16] : memref<264x32xf32, #tpu.memory_space<vmem>>, vector<32x32xf32>
    %cst_17 = arith.constant dense<0.000000e+00> : vector<32x128xf32>
    %36 = tpu.matmul %35, %33, %cst_17 {dimension_numbers = #tpu.dot_dimension_numbers<[1], [0], [0], [1], [0, 0, 1, 1], [], []>} : vector<32x32xf32>, vector<32x128xf32>, vector<32x128xf32> -> vector<32x128xf32>
    %c200_18 = arith.constant 200 : index
    %c3 = arith.constant 3 : index
    %37 = vector.load %arg2[%c200_18, %c3] : memref<264x32xf32, #tpu.memory_space<vmem>>, vector<32x1xf32>
    %38 = vector.broadcast %37 : vector<32x1xf32> to vector<32x128xf32>
    %39 = arith.addf %36, %38 : vector<32x128xf32>
    %cst_19 = arith.constant 5.000000e-01 : f32
    %40 = vector.broadcast %cst_19 : f32 to vector<32x128xf32>
    %41 = arith.mulf %40, %39 : vector<32x128xf32>
    %cst_20 = arith.constant 4.471500e-02 : f32
    %42 = vector.broadcast %cst_20 : f32 to vector<32x128xf32>
    %43 = arith.mulf %42, %39 : vector<32x128xf32>
    %44 = arith.mulf %43, %39 : vector<32x128xf32>
    %45 = arith.mulf %44, %39 : vector<32x128xf32>
    %46 = arith.addf %39, %45 : vector<32x128xf32>
    %cst_21 = arith.constant 0.797884583 : f32
    %47 = vector.broadcast %cst_21 : f32 to vector<32x128xf32>
    %48 = arith.mulf %47, %46 : vector<32x128xf32>
    %49 = math.tanh %48 : vector<32x128xf32>
    %cst_22 = arith.constant 1.000000e+00 : f32
    %50 = vector.broadcast %cst_22 : f32 to vector<32x128xf32>
    %51 = arith.addf %50, %49 : vector<32x128xf32>
    %52 = arith.mulf %41, %51 : vector<32x128xf32>
    %c160 = arith.constant 160 : index
    %c0_23 = arith.constant 0 : index
    %53 = vector.load %arg2[%c160, %c0_23] : memref<264x32xf32, #tpu.memory_space<vmem>>, vector<32x32xf32>
    %cst_24 = arith.constant dense<0.000000e+00> : vector<32x128xf32>
    %54 = tpu.matmul %53, %52, %cst_24 {dimension_numbers = #tpu.dot_dimension_numbers<[1], [0], [0], [1], [0, 0, 1, 1], [], []>} : vector<32x32xf32>, vector<32x128xf32>, vector<32x128xf32> -> vector<32x128xf32>
    %c200_25 = arith.constant 200 : index
    %c4 = arith.constant 4 : index
    %55 = vector.load %arg2[%c200_25, %c4] : memref<264x32xf32, #tpu.memory_space<vmem>>, vector<32x1xf32>
    %56 = vector.broadcast %55 : vector<32x1xf32> to vector<32x128xf32>
    %57 = arith.addf %54, %56 : vector<32x128xf32>
    %cst_26 = arith.constant 5.000000e-01 : f32
    %58 = vector.broadcast %cst_26 : f32 to vector<32x128xf32>
    %59 = arith.mulf %58, %57 : vector<32x128xf32>
    %cst_27 = arith.constant 4.471500e-02 : f32
    %60 = vector.broadcast %cst_27 : f32 to vector<32x128xf32>
    %61 = arith.mulf %60, %57 : vector<32x128xf32>
    %62 = arith.mulf %61, %57 : vector<32x128xf32>
    %63 = arith.mulf %62, %57 : vector<32x128xf32>
    %64 = arith.addf %57, %63 : vector<32x128xf32>
    %cst_28 = arith.constant 0.797884583 : f32
    %65 = vector.broadcast %cst_28 : f32 to vector<32x128xf32>
    %66 = arith.mulf %65, %64 : vector<32x128xf32>
    %67 = math.tanh %66 : vector<32x128xf32>
    %cst_29 = arith.constant 1.000000e+00 : f32
    %68 = vector.broadcast %cst_29 : f32 to vector<32x128xf32>
    %69 = arith.addf %68, %67 : vector<32x128xf32>
    %70 = arith.mulf %59, %69 : vector<32x128xf32>
    %c192 = arith.constant 192 : index
    %c0_30 = arith.constant 0 : index
    %71 = vector.load %arg2[%c192, %c0_30] : memref<264x32xf32, #tpu.memory_space<vmem>>, vector<8x32xf32>
    %cst_31 = arith.constant dense<0.000000e+00> : vector<8x128xf32>
    %72 = tpu.matmul %71, %70, %cst_31 {dimension_numbers = #tpu.dot_dimension_numbers<[1], [0], [0], [1], [0, 0, 1, 1], [], []>} : vector<8x32xf32>, vector<32x128xf32>, vector<8x128xf32> -> vector<8x128xf32>
    %c200_32 = arith.constant 200 : index
    %c5 = arith.constant 5 : index
    %73 = vector.load %arg2[%c200_32, %c5] : memref<264x32xf32, #tpu.memory_space<vmem>>, vector<8x1xf32>
    %74 = vector.broadcast %73 : vector<8x1xf32> to vector<8x128xf32>
    %75 = arith.addf %72, %74 : vector<8x128xf32>
    %76 = tpu.iota {dimensions = array<i32: 0>} : vector<8x128xi32>
    %c4_i32 = arith.constant 4 : i32
    %77 = vector.broadcast %c4_i32 : i32 to vector<8x128xi32>
    %78 = arith.cmpi slt, %76, %77 : vector<8x128xi32>
    %cst_33 = arith.constant -1.000000e+30 : f32
    %79 = vector.broadcast %cst_33 : f32 to vector<8x128xf32>
    %80 = arith.select %78, %75, %79 : vector<8x128xi1>, vector<8x128xf32>
    %cst_34 = arith.constant dense<0xFF800000> : vector<128xf32>
    %81 = vector.multi_reduction <maximumf>, %80, %cst_34 [0] : vector<8x128xf32> to vector<128xf32>
    %82 = vector.shape_cast %81 : vector<128xf32> to vector<1x128xf32>
    %83 = vector.broadcast %82 : vector<1x128xf32> to vector<8x128xf32>
    %84 = arith.subf %80, %83 : vector<8x128xf32>
    %85 = math.exp %84 : vector<8x128xf32>
    %cst_35 = arith.constant dense<0.000000e+00> : vector<128xf32>
    %86 = vector.multi_reduction <add>, %85, %cst_35 [0] : vector<8x128xf32> to vector<128xf32>
    %87 = vector.shape_cast %86 : vector<128xf32> to vector<1x128xf32>
    %88 = tpu.reciprocal %87 : vector<1x128xf32> -> vector<1x128xf32>
    %89 = vector.broadcast %88 : vector<1x128xf32> to vector<8x128xf32>
    %90 = arith.mulf %85, %89 : vector<8x128xf32>
    %c0_36 = arith.constant 0 : index
    %c0_37 = arith.constant 0 : index
    %91 = vector.load %arg3[%c0_36, %c0_37] : memref<48x128xf32, #tpu.memory_space<vmem>>, vector<32x128xf32>
    tpu.vector_store %arg3[%c0_36, %c0_37], %14 {strides = array<i32>} : memref<48x128xf32, #tpu.memory_space<vmem>>, vector<32x128xf32>,
    %c32_38 = arith.constant 32 : index
    %c0_39 = arith.constant 0 : index
    %92 = vector.load %arg3[%c32_38, %c0_39] : memref<48x128xf32, #tpu.memory_space<vmem>>, vector<8x128xf32>
    tpu.vector_store %arg3[%c32_38, %c0_39], %90 {strides = array<i32>} : memref<48x128xf32, #tpu.memory_space<vmem>>, vector<8x128xf32>,
    %c40 = arith.constant 40 : index
    %c0_40 = arith.constant 0 : index
    %93 = vector.load %arg3[%c40, %c0_40] : memref<48x128xf32, #tpu.memory_space<vmem>>, vector<8x128xf32>
    tpu.vector_store %arg3[%c40, %c0_40], %34 {strides = array<i32>} : memref<48x128xf32, #tpu.memory_space<vmem>>, vector<8x128xf32>,
    return
  }
  func.func @transform_0(%arg0: i32) -> (i32, i32) {
    %c0_i32 = arith.constant 0 : i32
    %c0_i32_0 = arith.constant 0 : i32
    return %c0_i32, %arg0 : i32, i32
  }
  func.func @transform_1(%arg0: i32) -> (i32, i32) {
    %c0_i32 = arith.constant 0 : i32
    %c0_i32_0 = arith.constant 0 : i32
    %c0_i32_1 = arith.constant 0 : i32
    return %c0_i32, %c0_i32_0 : i32, i32
  }
  func.func @transform_2(%arg0: i32) -> (i32, i32) {
    %c0_i32 = arith.constant 0 : i32
    %c0_i32_0 = arith.constant 0 : i32
    return %c0_i32, %arg0 : i32, i32
  }
}

</mosaic_0001>

<llo_original>
// kernel: model_forward.1
$region0: #{model_forward.1}
  #allocation0 [shape = 'u32[]', space=smem, size = 0x4, offset = 0x4, fixed_abs, tag = 'smem constant byte address 0x4 - core index']
  #allocation1 [shape = 'u32[144,128]{1,0:T(1,128)}', space=vmem, size = 0x12000, scoped, tag = 'internal scratch']
  %s0 = inlined_call_operand.vmem [shape: f32[32,128], index: 0, kind: input, shape index: {}]
  %s1 = inlined_call_operand.vmem [shape: f32[264,32], index: 1, kind: input, shape index: {}]
  %s2 = inlined_call_operand.vmem [shape: f32[48,128], index: 2, kind: output, shape index: {}]
  %s3 = sld [smem:[#allocation0]]
  $region18: #{model_forward.1} parent=0
    _
  %s5 = ssub.s32 1, %s3
  %s6 = scalar_select 0, %s5, %s3
  // Predicated region
  $region2: #{model_forward.1} parent=0 // pred_check
    _
  $region3: #{model_forward.1} parent=0 // pred_check_branch
    %8 = sbr.rel (0) target = $region5
  $region4: #{model_forward.1} parent=0 // pred_region
    _
  $region5: #{model_forward.1} parent=0 // pred_fallthru
    _
  // Predicated region
  $region6: #{model_forward.1} parent=0 // pred_check
    _
  $region7: #{model_forward.1} parent=0 // pred_check_branch
    %10 = sbr.rel (0) target = $region9
  $region8: #{model_forward.1} parent=0 // pred_region
    _
  $region9: #{model_forward.1} parent=0 // pred_fallthru
    _
  %v11 = vld [vmem:[%s0] sm:$0xff]
  %v12 = vld [vmem:[%s0 + $0x8] sm:$0xff]
  %v13 = vld [vmem:[%s0 + $0x10] sm:$0xff]
  %v14 = vld [vmem:[%s0 + $0x18] sm:$0xff]
  %v15 = vld [vmem:[%s1] sm:$0xff]
  %v16 = vld [vmem:[%s1 + $0x8] sm:$0xff]
  %v17 = vld [vmem:[%s1 + $0x10] sm:$0xff]
  %v18 = vld [vmem:[%s1 + $0x18] sm:$0xff]
  %v19 = vld [vmem:[%s1 + $0xc8] sm:$0xff]
  %v20 = vld [vmem:[%s1 + $0xd0] sm:$0xff]
  %v21 = vld [vmem:[%s1 + $0xd8] sm:$0xff]
  %v22 = vld [vmem:[%s1 + $0xe0] sm:$0xff]
  %24 = vset.pattern.permute.xlu0 0
  %25 = vperm.xlu0 %24, %v19
  %v26 = vpop.permute.xlu0 %25
  %29 = vset.pattern.permute.xlu0 0
  %30 = vperm.xlu0 %29, %v20
  %v31 = vpop.permute.xlu0 %30
  %34 = vset.pattern.permute.xlu0 0
  %35 = vperm.xlu0 %34, %v21
  %v36 = vpop.permute.xlu0 %35
  %39 = vset.pattern.permute.xlu0 0
  %40 = vperm.xlu0 %39, %v22
  %v41 = vpop.permute.xlu0 %40
  %vm43 = vcmask 261120
  %v45 = vsel %vm43, %v15, 0
  %v48 = vsel %vm43, %v16, 0
  %v51 = vsel %vm43, %v17, 0
  %v54 = vsel %vm43, %v18, 0
  %56 = vmatprep.subr.mxu0 0.0
  %57 = vmatpush1.msra.mxu0 %v11
  %58 = vmatprep.subr.mxu0 0.0
  %59 = vmatpush1.msra.mxu0 %v12
  %60 = vmatprep.subr.mxu0 0.0
  %61 = vmatpush1.msra.mxu0 %v13
  %62 = vmatprep.subr.mxu0 0.0
  %63 = vmatpush1.msra.mxu0 %v14
  %64 = vmatprep.subr.mxu0 0.0
  %65 = vmatpush1.msra.mxu0 0.0
  %66 = vmatprep.subr.mxu0 0.0
  %67 = vmatpush1.msra.mxu0 0.0
  %68 = vmatprep.subr.mxu0 0.0
  %69 = vmatpush1.msra.mxu0 0.0
  %70 = vmatprep.subr.mxu0 0.0
  %71 = vmatpush1.msra.mxu0 0.0
  %72 = vmatprep.subr.mxu0 0.0
  %73 = vmatpush1.msra.mxu0 0.0
  %74 = vmatprep.subr.mxu0 0.0
  %75 = vmatpush1.msra.mxu0 0.0
  %76 = vmatprep.subr.mxu0 0.0
  %77 = vmatpush1.msra.mxu0 0.0
  %78 = vmatprep.subr.mxu0 0.0
  %79 = vmatpush1.msra.mxu0 0.0
  %80 = vmatprep.subr.mxu0 0.0
  %81 = vmatpush1.msra.mxu0 0.0
  %82 = vmatprep.subr.mxu0 0.0
  %83 = vmatpush1.msra.mxu0 0.0
  %84 = vmatprep.subr.mxu0 0.0
  %85 = vmatpush1.msra.mxu0 0.0
  %86 = vmatprep.subr.mxu0 0.0
  %87 = vmatpush1.msra.mxu0 0.0
  %88 = vmatprep.subr.mxu0 0.0
  %89 = vmatpush1.msra.mxu0 0.0
  %90 = vmatprep.subr.mxu0 0.0
  %91 = vmatpush1.msra.mxu0 0.0
  %92 = vmatprep.subr.mxu0 0.0
  %93 = vmatpush1.msra.mxu0 0.0
  %94 = vmatprep.subr.mxu0 0.0
  %95 = vmatpush1.msra.mxu0 0.0
  %96 = vmatprep.subr.mxu0 0.0
  %97 = vmatpush1.msra.mxu0 0.0
  %98 = vmatprep.subr.mxu0 0.0
  %99 = vmatpush1.msra.mxu0 0.0
  %100 = vmatprep.subr.mxu0 0.0
  %101 = vmatpush1.msra.mxu0 0.0
  %102 = vmatprep.subr.mxu0 0.0
  %103 = vmatpush1.msra.mxu0 0.0
  %104 = vmatprep.subr.mxu0 0.0
  %105 = vmatpush1.msra.mxu0 0.0
  %106 = vmatprep.subr.mxu0 0.0
  %107 = vmatpush1.msra.mxu0 0.0
  %108 = vmatprep.subr.mxu0 0.0
  %109 = vmatpush1.msra.mxu0 0.0
  %110 = vmatprep.subr.mxu0 0.0
  %111 = vmatpush1.msra.mxu0 0.0
  %112 = vmatprep.subr.mxu0 0.0
  %113 = vmatpush1.msra.mxu0 0.0
  %114 = vmatprep.subr.mxu0 0.0
  %115 = vmatpush1.msra.mxu0 0.0
  %116 = vmatprep.subr.mxu0 0.0
  %117 = vmatpush1.msra.mxu0 0.0
  %118 = vmatprep.subr.mxu0 0.0
  %119 = vmatpush1.msra.mxu0 0.0
  %120 = vmatprep.mubr.f32.mxu0 0.0
  %121 = vmatmul.mubr.f32.gmra.mrb[0].mxu0 %v45
  %v122 = vpop.f32.mrb[0].mxu0
  %v123 = vadd.f32 %v26, %v122
  %v124 = vpop.f32.mrb[0].mxu0
  %125 = vmatprep.mubr.f32.mxu0 0.0
  %126 = vmatmul.mubr.f32.gmra.mrb[0].mxu0 %v48
  %v127 = vpop.f32.mrb[0].mxu0
  %v128 = vadd.f32 %v31, %v127
  %v129 = vpop.f32.mrb[0].mxu0
  %130 = vmatprep.mubr.f32.mxu0 0.0
  %131 = vmatmul.mubr.f32.gmra.mrb[0].mxu0 %v51
  %v132 = vpop.f32.mrb[0].mxu0
  %v133 = vadd.f32 %v36, %v132
  %v134 = vpop.f32.mrb[0].mxu0
  %135 = vmatprep.mubr.f32.mxu0 0.0
  %136 = vmatmul.mubr.f32.gmra.mrb[0].mxu0 %v54
  %v137 = vpop.f32.mrb[0].mxu0
  %v138 = vadd.f32 %v41, %v137
  %v139 = vpop.f32.mrb[0].mxu0
  %140 = vdwg.mxu0
  %v141 = vmax.f32 %v123, 0.0
  %v142 = vmax.f32 %v128, 0.0
  %v143 = vmax.f32 %v133, 0.0
  %v144 = vmax.f32 %v138, 0.0
  %v145 = vld [vmem:[%s1 + $0x20] sm:$0xff]
  %v146 = vld [vmem:[%s1 + $0x28] sm:$0xff]
  %v147 = vld [vmem:[%s1 + $0x30] sm:$0xff]
  %v148 = vld [vmem:[%s1 + $0x38] sm:$0xff]
  %149 = vset.pattern.permute.xlu0 1
  %150 = vperm.xlu0 %149, %v19
  %v151 = vpop.permute.xlu0 %150
  %153 = vset.pattern.permute.xlu0 1
  %154 = vperm.xlu0 %153, %v20
  %v155 = vpop.permute.xlu0 %154
  %157 = vset.pattern.permute.xlu0 1
  %158 = vperm.xlu0 %157, %v21
  %v159 = vpop.permute.xlu0 %158
  %161 = vset.pattern.permute.xlu0 1
  %162 = vperm.xlu0 %161, %v22
  %v163 = vpop.permute.xlu0 %162
  %v166 = vsel %vm43, %v145, 0
  %v169 = vsel %vm43, %v146, 0
  %v172 = vsel %vm43, %v147, 0
  %v175 = vsel %vm43, %v148, 0
  %177 = vmatprep.subr.mxu0 0.0
  %178 = vmatpush1.msra.mxu0 %v141
  %179 = vmatprep.subr.mxu0 0.0
  %180 = vmatpush1.msra.mxu0 %v142
  %181 = vmatprep.subr.mxu0 0.0
  %182 = vmatpush1.msra.mxu0 %v143
  %183 = vmatprep.subr.mxu0 0.0
  %184 = vmatpush1.msra.mxu0 %v144
  %185 = vmatprep.subr.mxu0 0.0
  %186 = vmatpush1.msra.mxu0 0.0
  %187 = vmatprep.subr.mxu0 0.0
  %188 = vmatpush1.msra.mxu0 0.0
  %189 = vmatprep.subr.mxu0 0.0
  %190 = vmatpush1.msra.mxu0 0.0
  %191 = vmatprep.subr.mxu0 0.0
  %192 = vmatpush1.msra.mxu0 0.0
  %193 = vmatprep.subr.mxu0 0.0
  %194 = vmatpush1.msra.mxu0 0.0
  %195 = vmatprep.subr.mxu0 0.0
  %196 = vmatpush1.msra.mxu0 0.0
  %197 = vmatprep.subr.mxu0 0.0
  %198 = vmatpush1.msra.mxu0 0.0
  %199 = vmatprep.subr.mxu0 0.0
  %200 = vmatpush1.msra.mxu0 0.0
  %201 = vmatprep.subr.mxu0 0.0
  %202 = vmatpush1.msra.mxu0 0.0
  %203 = vmatprep.subr.mxu0 0.0
  %204 = vmatpush1.msra.mxu0 0.0
  %205 = vmatprep.subr.mxu0 0.0
  %206 = vmatpush1.msra.mxu0 0.0
  %207 = vmatprep.subr.mxu0 0.0
  %208 = vmatpush1.msra.mxu0 0.0
  %209 = vmatprep.subr.mxu0 0.0
  %210 = vmatpush1.msra.mxu0 0.0
  %211 = vmatprep.subr.mxu0 0.0
  %212 = vmatpush1.msra.mxu0 0.0
  %213 = vmatprep.subr.mxu0 0.0
  %214 = vmatpush1.msra.mxu0 0.0
  %215 = vmatprep.subr.mxu0 0.0
  %216 = vmatpush1.msra.mxu0 0.0
  %217 = vmatprep.subr.mxu0 0.0
  %218 = vmatpush1.msra.mxu0 0.0
  %219 = vmatprep.subr.mxu0 0.0
  %220 = vmatpush1.msra.mxu0 0.0
  %221 = vmatprep.subr.mxu0 0.0
  %222 = vmatpush1.msra.mxu0 0.0
  %223 = vmatprep.subr.mxu0 0.0
  %224 = vmatpush1.msra.mxu0 0.0
  %225 = vmatprep.subr.mxu0 0.0
  %226 = vmatpush1.msra.mxu0 0.0
  %227 = vmatprep.subr.mxu0 0.0
  %228 = vmatpush1.msra.mxu0 0.0
  %229 = vmatprep.subr.mxu0 0.0
  %230 = vmatpush1.msra.mxu0 0.0
  %231 = vmatprep.subr.mxu0 0.0
  %232 = vmatpush1.msra.mxu0 0.0
  %233 = vmatprep.subr.mxu0 0.0
  %234 = vmatpush1.msra.mxu0 0.0
  %235 = vmatprep.subr.mxu0 0.0
  %236 = vmatpush1.msra.mxu0 0.0
  %237 = vmatprep.subr.mxu0 0.0
  %238 = vmatpush1.msra.mxu0 0.0
  %239 = vmatprep.subr.mxu0 0.0
  %240 = vmatpush1.msra.mxu0 0.0
  %241 = vmatprep.mubr.f32.mxu0 0.0
  %242 = vmatmul.mubr.f32.gmra.mrb[0].mxu0 %v166
  %v243 = vpop.f32.mrb[0].mxu0
  %v244 = vadd.f32 %v151, %v243
  %v245 = vpop.f32.mrb[0].mxu0
  %246 = vmatprep.mubr.f32.mxu0 0.0
  %247 = vmatmul.mubr.f32.gmra.mrb[0].mxu0 %v169
  %v248 = vpop.f32.mrb[0].mxu0
  %v249 = vadd.f32 %v155, %v248
  %v250 = vpop.f32.mrb[0].mxu0
  %251 = vmatprep.mubr.f32.mxu0 0.0
  %252 = vmatmul.mubr.f32.gmra.mrb[0].mxu0 %v172
  %v253 = vpop.f32.mrb[0].mxu0
  %v254 = vadd.f32 %v159, %v253
  %v255 = vpop.f32.mrb[0].mxu0
  %256 = vmatprep.mubr.f32.mxu0 0.0
  %257 = vmatmul.mubr.f32.gmra.mrb[0].mxu0 %v175
  %v258 = vpop.f32.mrb[0].mxu0
  %v259 = vadd.f32 %v163, %v258
  %v260 = vpop.f32.mrb[0].mxu0
  %261 = vdwg.mxu0
  %v262 = vmax.f32 %v244, 0.0
  %v263 = vmax.f32 %v249, 0.0
  %v264 = vmax.f32 %v254, 0.0
  %v265 = vmax.f32 %v259, 0.0
  %v266 = vld [vmem:[%s1 + $0x40] sm:$0xff]
  %v267 = vld [vmem:[%s1 + $0x48] sm:$0xff]
  %v268 = vld [vmem:[%s1 + $0x50] sm:$0xff]
  %v269 = vld [vmem:[%s1 + $0x58] sm:$0xff]
  %v270 = vld [vmem:[%s1 + $0x60] sm:$0xff]
  %v271 = vld [vmem:[%s1 + $0x68] sm:$0xff]
  %v272 = vld [vmem:[%s1 + $0x70] sm:$0xff]
  %v273 = vld [vmem:[%s1 + $0x78] sm:$0xff]
  %v274 = vld [vmem:[%s1 + $0xc8] sm:$0xff]
  %v275 = vld [vmem:[%s1 + $0xd0] sm:$0xff]
  %v276 = vld [vmem:[%s1 + $0xd8] sm:$0xff]
  %v277 = vld [vmem:[%s1 + $0xe0] sm:$0xff]
  %v278 = vld [vmem:[%s1 + $0xe8] sm:$0xff]
  %v279 = vld [vmem:[%s1 + $0xf0] sm:$0xff]
  %v280 = vld [vmem:[%s1 + $0xf8] sm:$0xff]
  %v281 = vld [vmem:[%s1 + $0x100] sm:$0xff]
  %283 = vset.pattern.permute.xlu0 2
  %284 = vperm.xlu0 %283, %v274
  %v285 = vpop.permute.xlu0 %284
  %288 = vset.pattern.permute.xlu0 2
  %289 = vperm.xlu0 %288, %v275
  %v290 = vpop.permute.xlu0 %289
  %293 = vset.pattern.permute.xlu0 2
  %294 = vperm.xlu0 %293, %v276
  %v295 = vpop.permute.xlu0 %294
  %298 = vset.pattern.permute.xlu0 2
  %299 = vperm.xlu0 %298, %v277
  %v300 = vpop.permute.xlu0 %299
  %303 = vset.pattern.permute.xlu0 2
  %304 = vperm.xlu0 %303, %v278
  %v305 = vpop.permute.xlu0 %304
  %308 = vset.pattern.permute.xlu0 2
  %309 = vperm.xlu0 %308, %v279
  %v310 = vpop.permute.xlu0 %309
  %312 = vset.pattern.permute.xlu0 2
  %313 = vperm.xlu0 %312, %v280
  %v314 = vpop.permute.xlu0 %313
  %316 = vset.pattern.permute.xlu0 2
  %317 = vperm.xlu0 %316, %v281
  %v318 = vpop.permute.xlu0 %317
  %v320 = vsel %vm43, %v266, 0
  %v323 = vsel %vm43, %v267, 0
  %v326 = vsel %vm43, %v268, 0
  %v329 = vsel %vm43, %v269, 0
  %v332 = vsel %vm43, %v270, 0
  %v335 = vsel %vm43, %v271, 0
  %v338 = vsel %vm43, %v272, 0
  %v341 = vsel %vm43, %v273, 0
  %343 = vmatprep.subr.mxu0 0.0
  %344 = vmatpush1.msra.mxu0 %v262
  %345 = vmatprep.subr.mxu0 0.0
  %346 = vmatpush1.msra.mxu0 %v263
  %347 = vmatprep.subr.mxu0 0.0
  %348 = vmatpush1.msra.mxu0 %v264
  %349 = vmatprep.subr.mxu0 0.0
  %350 = vmatpush1.msra.mxu0 %v265
  %351 = vmatprep.subr.mxu0 0.0
  %352 = vmatpush1.msra.mxu0 0.0
  %353 = vmatprep.subr.mxu0 0.0
  %354 = vmatpush1.msra.mxu0 0.0
  %355 = vmatprep.subr.mxu0 0.0
  %356 = vmatpush1.msra.mxu0 0.0
  %357 = vmatprep.subr.mxu0 0.0
  %358 = vmatpush1.msra.mxu0 0.0
  %359 = vmatprep.subr.mxu0 0.0
  %360 = vmatpush1.msra.mxu0 0.0
  %361 = vmatprep.subr.mxu0 0.0
  %362 = vmatpush1.msra.mxu0 0.0
  %363 = vmatprep.subr.mxu0 0.0
  %364 = vmatpush1.msra.mxu0 0.0
  %365 = vmatprep.subr.mxu0 0.0
  %366 = vmatpush1.msra.mxu0 0.0
  %367 = vmatprep.subr.mxu0 0.0
  %368 = vmatpush1.msra.mxu0 0.0
  %369 = vmatprep.subr.mxu0 0.0
  %370 = vmatpush1.msra.mxu0 0.0
  %371 = vmatprep.subr.mxu0 0.0
  %372 = vmatpush1.msra.mxu0 0.0
  %373 = vmatprep.subr.mxu0 0.0
  %374 = vmatpush1.msra.mxu0 0.0
  %375 = vmatprep.subr.mxu0 0.0
  %376 = vmatpush1.msra.mxu0 0.0
  %377 = vmatprep.subr.mxu0 0.0
  %378 = vmatpush1.msra.mxu0 0.0
  %379 = vmatprep.subr.mxu0 0.0
  %380 = vmatpush1.msra.mxu0 0.0
  %381 = vmatprep.subr.mxu0 0.0
  %382 = vmatpush1.msra.mxu0 0.0
  %383 = vmatprep.subr.mxu0 0.0
  %384 = vmatpush1.msra.mxu0 0.0
  %385 = vmatprep.subr.mxu0 0.0
  %386 = vmatpush1.msra.mxu0 0.0
  %387 = vmatprep.subr.mxu0 0.0
  %388 = vmatpush1.msra.mxu0 0.0
  %389 = vmatprep.subr.mxu0 0.0
  %390 = vmatpush1.msra.mxu0 0.0
  %391 = vmatprep.subr.mxu0 0.0
  %392 = vmatpush1.msra.mxu0 0.0
  %393 = vmatprep.subr.mxu0 0.0
  %394 = vmatpush1.msra.mxu0 0.0
  %395 = vmatprep.subr.mxu0 0.0
  %396 = vmatpush1.msra.mxu0 0.0
  %397 = vmatprep.subr.mxu0 0.0
  %398 = vmatpush1.msra.mxu0 0.0
  %399 = vmatprep.subr.mxu0 0.0
  %400 = vmatpush1.msra.mxu0 0.0
  %401 = vmatprep.subr.mxu0 0.0
  %402 = vmatpush1.msra.mxu0 0.0
  %403 = vmatprep.subr.mxu0 0.0
  %404 = vmatpush1.msra.mxu0 0.0
  %405 = vmatprep.subr.mxu0 0.0
  %406 = vmatpush1.msra.mxu0 0.0
  %407 = vmatprep.mubr.f32.mxu0 0.0
  %408 = vmatmul.mubr.f32.gmra.mrb[0].mxu0 %v320
  %v409 = vpop.f32.mrb[0].mxu0
  %v410 = vadd.f32 %v285, %v409
  %v411 = vpop.f32.mrb[0].mxu0
  %412 = vmatprep.mubr.f32.mxu0 0.0
  %413 = vmatmul.mubr.f32.gmra.mrb[0].mxu0 %v323
  %v414 = vpop.f32.mrb[0].mxu0
  %v415 = vadd.f32 %v290, %v414
  %v416 = vpop.f32.mrb[0].mxu0
  %417 = vmatprep.mubr.f32.mxu0 0.0
  %418 = vmatmul.mubr.f32.gmra.mrb[0].mxu0 %v326
  %v419 = vpop.f32.mrb[0].mxu0
  %v420 = vadd.f32 %v295, %v419
  %v421 = vpop.f32.mrb[0].mxu0
  %422 = vmatprep.mubr.f32.mxu0 0.0
  %423 = vmatmul.mubr.f32.gmra.mrb[0].mxu0 %v329
  %v424 = vpop.f32.mrb[0].mxu0
  %v425 = vadd.f32 %v300, %v424
  %v426 = vpop.f32.mrb[0].mxu0
  %427 = vmatprep.mubr.f32.mxu0 0.0
  %428 = vmatmul.mubr.f32.gmra.mrb[0].mxu0 %v332
  %v429 = vpop.f32.mrb[0].mxu0
  %v430 = vadd.f32 %v305, %v429
  %v431 = vpop.f32.mrb[0].mxu0
  %432 = vmatprep.mubr.f32.mxu0 0.0
  %433 = vmatmul.mubr.f32.gmra.mrb[0].mxu0 %v335
  %v434 = vpop.f32.mrb[0].mxu0
  %v435 = vpop.f32.mrb[0].mxu0
  %436 = vmatprep.mubr.f32.mxu0 0.0
  %437 = vmatmul.mubr.f32.gmra.mrb[0].mxu0 %v338
  %v438 = vpop.f32.mrb[0].mxu0
  %v439 = vpop.f32.mrb[0].mxu0
  %440 = vmatprep.mubr.f32.mxu0 0.0
  %441 = vmatmul.mubr.f32.gmra.mrb[0].mxu0 %v341
  %v442 = vpop.f32.mrb[0].mxu0
  %v443 = vpop.f32.mrb[0].mxu0
  %444 = vdwg.mxu0
  %v445 = vmul.f32 %v410, 0.5
  %v446 = vmul.f32 %v415, 0.5
  %v447 = vmul.f32 %v420, 0.5
  %v448 = vmul.f32 %v425, 0.5
  %v449 = vmul.f32 %v410, 0.044715
  %v450 = vmul.f32 %v415, 0.044715
  %v451 = vmul.f32 %v420, 0.044715
  %v452 = vmul.f32 %v425, 0.044715
  %v453 = vmul.f32 %v449, %v410
  %v454 = vmul.f32 %v450, %v415
  %v455 = vmul.f32 %v451, %v420
  %v456 = vmul.f32 %v452, %v425
  %v457 = vmul.f32 %v453, %v410
  %v458 = vmul.f32 %v454, %v415
  %v459 = vmul.f32 %v455, %v420
  %v460 = vmul.f32 %v456, %v425
  %v461 = vadd.f32 %v410, %v457
  %v462 = vadd.f32 %v415, %v458
  %v463 = vadd.f32 %v420, %v459
  %v464 = vadd.f32 %v425, %v460
  %v465 = vmul.f32 %v461, 0.7978846
  %v466 = vmul.f32 %v462, 0.7978846
  %v467 = vmul.f32 %v463, 0.7978846
  %v468 = vmul.f32 %v464, 0.7978846
  %v469 = vtanh.pop %v465
  %v470 = vtanh.pop %v466
  %v471 = vtanh.pop %v467
  %v472 = vtanh.pop %v468
  %v473 = vadd.f32 %v469, 1.0
  %v474 = vadd.f32 %v470, 1.0
  %v475 = vadd.f32 %v471, 1.0
  %v476 = vadd.f32 %v472, 1.0
  %v477 = vmul.f32 %v445, %v473
  %v478 = vmul.f32 %v446, %v474
  %v479 = vmul.f32 %v447, %v475
  %v480 = vmul.f32 %v448, %v476
  %v481 = vld [vmem:[%s1 + $0x80] sm:$0xff]
  %v482 = vld [vmem:[%s1 + $0x88] sm:$0xff]
  %v483 = vld [vmem:[%s1 + $0x90] sm:$0xff]
  %v484 = vld [vmem:[%s1 + $0x98] sm:$0xff]
  %485 = vset.pattern.permute.xlu0 3
  %486 = vperm.xlu0 %485, %v19
  %v487 = vpop.permute.xlu0 %486
  %489 = vset.pattern.permute.xlu0 3
  %490 = vperm.xlu0 %489, %v20
  %v491 = vpop.permute.xlu0 %490
  %493 = vset.pattern.permute.xlu0 3
  %494 = vperm.xlu0 %493, %v21
  %v495 = vpop.permute.xlu0 %494
  %497 = vset.pattern.permute.xlu0 3
  %498 = vperm.xlu0 %497, %v22
  %v499 = vpop.permute.xlu0 %498
  %v502 = vsel %vm43, %v481, 0
  %v505 = vsel %vm43, %v482, 0
  %v508 = vsel %vm43, %v483, 0
  %v511 = vsel %vm43, %v484, 0
  %513 = vmatprep.subr.mxu0 0.0
  %514 = vmatpush1.msra.mxu0 %v477
  %515 = vmatprep.subr.mxu0 0.0
  %516 = vmatpush1.msra.mxu0 %v478
  %517 = vmatprep.subr.mxu0 0.0
  %518 = vmatpush1.msra.mxu0 %v479
  %519 = vmatprep.subr.mxu0 0.0
  %520 = vmatpush1.msra.mxu0 %v480
  %521 = vmatprep.subr.mxu0 0.0
  %522 = vmatpush1.msra.mxu0 0.0
  %523 = vmatprep.subr.mxu0 0.0
  %524 = vmatpush1.msra.mxu0 0.0
  %525 = vmatprep.subr.mxu0 0.0
  %526 = vmatpush1.msra.mxu0 0.0
  %527 = vmatprep.subr.mxu0 0.0
  %528 = vmatpush1.msra.mxu0 0.0
  %529 = vmatprep.subr.mxu0 0.0
  %530 = vmatpush1.msra.mxu0 0.0
  %531 = vmatprep.subr.mxu0 0.0
  %532 = vmatpush1.msra.mxu0 0.0
  %533 = vmatprep.subr.mxu0 0.0
  %534 = vmatpush1.msra.mxu0 0.0
  %535 = vmatprep.subr.mxu0 0.0
  %536 = vmatpush1.msra.mxu0 0.0
  %537 = vmatprep.subr.mxu0 0.0
  %538 = vmatpush1.msra.mxu0 0.0
  %539 = vmatprep.subr.mxu0 0.0
  %540 = vmatpush1.msra.mxu0 0.0
  %541 = vmatprep.subr.mxu0 0.0
  %542 = vmatpush1.msra.mxu0 0.0
  %543 = vmatprep.subr.mxu0 0.0
  %544 = vmatpush1.msra.mxu0 0.0
  %545 = vmatprep.subr.mxu0 0.0
  %546 = vmatpush1.msra.mxu0 0.0
  %547 = vmatprep.subr.mxu0 0.0
  %548 = vmatpush1.msra.mxu0 0.0
  %549 = vmatprep.subr.mxu0 0.0
  %550 = vmatpush1.msra.mxu0 0.0
  %551 = vmatprep.subr.mxu0 0.0
  %552 = vmatpush1.msra.mxu0 0.0
  %553 = vmatprep.subr.mxu0 0.0
  %554 = vmatpush1.msra.mxu0 0.0
  %555 = vmatprep.subr.mxu0 0.0
  %556 = vmatpush1.msra.mxu0 0.0
  %557 = vmatprep.subr.mxu0 0.0
  %558 = vmatpush1.msra.mxu0 0.0
  %559 = vmatprep.subr.mxu0 0.0
  %560 = vmatpush1.msra.mxu0 0.0
  %561 = vmatprep.subr.mxu0 0.0
  %562 = vmatpush1.msra.mxu0 0.0
  %563 = vmatprep.subr.mxu0 0.0
  %564 = vmatpush1.msra.mxu0 0.0
  %565 = vmatprep.subr.mxu0 0.0
  %566 = vmatpush1.msra.mxu0 0.0
  %567 = vmatprep.subr.mxu0 0.0
  %568 = vmatpush1.msra.mxu0 0.0
  %569 = vmatprep.subr.mxu0 0.0
  %570 = vmatpush1.msra.mxu0 0.0
  %571 = vmatprep.subr.mxu0 0.0
  %572 = vmatpush1.msra.mxu0 0.0
  %573 = vmatprep.subr.mxu0 0.0
  %574 = vmatpush1.msra.mxu0 0.0
  %575 = vmatprep.subr.mxu0 0.0
  %576 = vmatpush1.msra.mxu0 0.0
  %577 = vmatprep.mubr.f32.mxu0 0.0
  %578 = vmatmul.mubr.f32.gmra.mrb[0].mxu0 %v502
  %v579 = vpop.f32.mrb[0].mxu0
  %v580 = vadd.f32 %v487, %v579
  %v581 = vpop.f32.mrb[0].mxu0
  %582 = vmatprep.mubr.f32.mxu0 0.0
  %583 = vmatmul.mubr.f32.gmra.mrb[0].mxu0 %v505
  %v584 = vpop.f32.mrb[0].mxu0
  %v585 = vadd.f32 %v491, %v584
  %v586 = vpop.f32.mrb[0].mxu0
  %587 = vmatprep.mubr.f32.mxu0 0.0
  %588 = vmatmul.mubr.f32.gmra.mrb[0].mxu0 %v508
  %v589 = vpop.f32.mrb[0].mxu0
  %v590 = vadd.f32 %v495, %v589
  %v591 = vpop.f32.mrb[0].mxu0
  %592 = vmatprep.mubr.f32.mxu0 0.0
  %593 = vmatmul.mubr.f32.gmra.mrb[0].mxu0 %v511
  %v594 = vpop.f32.mrb[0].mxu0
  %v595 = vadd.f32 %v499, %v594
  %v596 = vpop.f32.mrb[0].mxu0
  %597 = vdwg.mxu0
  %v598 = vmul.f32 %v580, 0.5
  %v599 = vmul.f32 %v585, 0.5
  %v600 = vmul.f32 %v590, 0.5
  %v601 = vmul.f32 %v595, 0.5
  %v602 = vmul.f32 %v580, 0.044715
  %v603 = vmul.f32 %v585, 0.044715
  %v604 = vmul.f32 %v590, 0.044715
  %v605 = vmul.f32 %v595, 0.044715
  %v606 = vmul.f32 %v602, %v580
  %v607 = vmul.f32 %v603, %v585
  %v608 = vmul.f32 %v604, %v590
  %v609 = vmul.f32 %v605, %v595
  %v610 = vmul.f32 %v606, %v580
  %v611 = vmul.f32 %v607, %v585
  %v612 = vmul.f32 %v608, %v590
  %v613 = vmul.f32 %v609, %v595
  %v614 = vadd.f32 %v580, %v610
  %v615 = vadd.f32 %v585, %v611
  %v616 = vadd.f32 %v590, %v612
  %v617 = vadd.f32 %v595, %v613
  %v618 = vmul.f32 %v614, 0.7978846
  %v619 = vmul.f32 %v615, 0.7978846
  %v620 = vmul.f32 %v616, 0.7978846
  %v621 = vmul.f32 %v617, 0.7978846
  %v622 = vtanh.pop %v618
  %v623 = vtanh.pop %v619
  %v624 = vtanh.pop %v620
  %v625 = vtanh.pop %v621
  %v626 = vadd.f32 %v622, 1.0
  %v627 = vadd.f32 %v623, 1.0
  %v628 = vadd.f32 %v624, 1.0
  %v629 = vadd.f32 %v625, 1.0
  %v630 = vmul.f32 %v598, %v626
  %v631 = vmul.f32 %v599, %v627
  %v632 = vmul.f32 %v600, %v628
  %v633 = vmul.f32 %v601, %v629
  %v634 = vld [vmem:[%s1 + $0xa0] sm:$0xff]
  %v635 = vld [vmem:[%s1 + $0xa8] sm:$0xff]
  %v636 = vld [vmem:[%s1 + $0xb0] sm:$0xff]
  %v637 = vld [vmem:[%s1 + $0xb8] sm:$0xff]
  %638 = vset.pattern.permute.xlu0 4
  %639 = vperm.xlu0 %638, %v19
  %v640 = vpop.permute.xlu0 %639
  %642 = vset.pattern.permute.xlu0 4
  %643 = vperm.xlu0 %642, %v20
  %v644 = vpop.permute.xlu0 %643
  %646 = vset.pattern.permute.xlu0 4
  %647 = vperm.xlu0 %646, %v21
  %v648 = vpop.permute.xlu0 %647
  %650 = vset.pattern.permute.xlu0 4
  %651 = vperm.xlu0 %650, %v22
  %v652 = vpop.permute.xlu0 %651
  %v655 = vsel %vm43, %v634, 0
  %v658 = vsel %vm43, %v635, 0
  %v661 = vsel %vm43, %v636, 0
  %v664 = vsel %vm43, %v637, 0
  %666 = vmatprep.subr.mxu0 0.0
  %667 = vmatpush1.msra.mxu0 %v630
  %668 = vmatprep.subr.mxu0 0.0
  %669 = vmatpush1.msra.mxu0 %v631
  %670 = vmatprep.subr.mxu0 0.0
  %671 = vmatpush1.msra.mxu0 %v632
  %672 = vmatprep.subr.mxu0 0.0
  %673 = vmatpush1.msra.mxu0 %v633
  %674 = vmatprep.subr.mxu0 0.0
  %675 = vmatpush1.msra.mxu0 0.0
  %676 = vmatprep.subr.mxu0 0.0
  %677 = vmatpush1.msra.mxu0 0.0
  %678 = vmatprep.subr.mxu0 0.0
  %679 = vmatpush1.msra.mxu0 0.0
  %680 = vmatprep.subr.mxu0 0.0
  %681 = vmatpush1.msra.mxu0 0.0
  %682 = vmatprep.subr.mxu0 0.0
  %683 = vmatpush1.msra.mxu0 0.0
  %684 = vmatprep.subr.mxu0 0.0
  %685 = vmatpush1.msra.mxu0 0.0
  %686 = vmatprep.subr.mxu0 0.0
  %687 = vmatpush1.msra.mxu0 0.0
  %688 = vmatprep.subr.mxu0 0.0
  %689 = vmatpush1.msra.mxu0 0.0
  %690 = vmatprep.subr.mxu0 0.0
  %691 = vmatpush1.msra.mxu0 0.0
  %692 = vmatprep.subr.mxu0 0.0
  %693 = vmatpush1.msra.mxu0 0.0
  %694 = vmatprep.subr.mxu0 0.0
  %695 = vmatpush1.msra.mxu0 0.0
  %696 = vmatprep.subr.mxu0 0.0
  %697 = vmatpush1.msra.mxu0 0.0
  %698 = vmatprep.subr.mxu0 0.0
  %699 = vmatpush1.msra.mxu0 0.0
  %700 = vmatprep.subr.mxu0 0.0
  %701 = vmatpush1.msra.mxu0 0.0
  %702 = vmatprep.subr.mxu0 0.0
  %703 = vmatpush1.msra.mxu0 0.0
  %704 = vmatprep.subr.mxu0 0.0
  %705 = vmatpush1.msra.mxu0 0.0
  %706 = vmatprep.subr.mxu0 0.0
  %707 = vmatpush1.msra.mxu0 0.0
  %708 = vmatprep.subr.mxu0 0.0
  %709 = vmatpush1.msra.mxu0 0.0
  %710 = vmatprep.subr.mxu0 0.0
  %711 = vmatpush1.msra.mxu0 0.0
  %712 = vmatprep.subr.mxu0 0.0
  %713 = vmatpush1.msra.mxu0 0.0
  %714 = vmatprep.subr.mxu0 0.0
  %715 = vmatpush1.msra.mxu0 0.0
  %716 = vmatprep.subr.mxu0 0.0
  %717 = vmatpush1.msra.mxu0 0.0
  %718 = vmatprep.subr.mxu0 0.0
  %719 = vmatpush1.msra.mxu0 0.0
  %720 = vmatprep.subr.mxu0 0.0
  %721 = vmatpush1.msra.mxu0 0.0
  %722 = vmatprep.subr.mxu0 0.0
  %723 = vmatpush1.msra.mxu0 0.0
  %724 = vmatprep.subr.mxu0 0.0
  %725 = vmatpush1.msra.mxu0 0.0
  %726 = vmatprep.subr.mxu0 0.0
  %727 = vmatpush1.msra.mxu0 0.0
  %728 = vmatprep.subr.mxu0 0.0
  %729 = vmatpush1.msra.mxu0 0.0
  %730 = vmatprep.mubr.f32.mxu0 0.0
  %731 = vmatmul.mubr.f32.gmra.mrb[0].mxu0 %v655
  %v732 = vpop.f32.mrb[0].mxu0
  %v733 = vadd.f32 %v640, %v732
  %v734 = vpop.f32.mrb[0].mxu0
  %735 = vmatprep.mubr.f32.mxu0 0.0
  %736 = vmatmul.mubr.f32.gmra.mrb[0].mxu0 %v658
  %v737 = vpop.f32.mrb[0].mxu0
  %v738 = vadd.f32 %v644, %v737
  %v739 = vpop.f32.mrb[0].mxu0
  %740 = vmatprep.mubr.f32.mxu0 0.0
  %741 = vmatmul.mubr.f32.gmra.mrb[0].mxu0 %v661
  %v742 = vpop.f32.mrb[0].mxu0
  %v743 = vadd.f32 %v648, %v742
  %v744 = vpop.f32.mrb[0].mxu0
  %745 = vmatprep.mubr.f32.mxu0 0.0
  %746 = vmatmul.mubr.f32.gmra.mrb[0].mxu0 %v664
  %v747 = vpop.f32.mrb[0].mxu0
  %v748 = vadd.f32 %v652, %v747
  %v749 = vpop.f32.mrb[0].mxu0
  %750 = vdwg.mxu0
  %v751 = vmul.f32 %v733, 0.5
  %v752 = vmul.f32 %v738, 0.5
  %v753 = vmul.f32 %v743, 0.5
  %v754 = vmul.f32 %v748, 0.5
  %v755 = vmul.f32 %v733, 0.044715
  %v756 = vmul.f32 %v738, 0.044715
  %v757 = vmul.f32 %v743, 0.044715
  %v758 = vmul.f32 %v748, 0.044715
  %v759 = vmul.f32 %v755, %v733
  %v760 = vmul.f32 %v756, %v738
  %v761 = vmul.f32 %v757, %v743
  %v762 = vmul.f32 %v758, %v748
  %v763 = vmul.f32 %v759, %v733
  %v764 = vmul.f32 %v760, %v738
  %v765 = vmul.f32 %v761, %v743
  %v766 = vmul.f32 %v762, %v748
  %v767 = vadd.f32 %v733, %v763
  %v768 = vadd.f32 %v738, %v764
  %v769 = vadd.f32 %v743, %v765
  %v770 = vadd.f32 %v748, %v766
  %v771 = vmul.f32 %v767, 0.7978846
  %v772 = vmul.f32 %v768, 0.7978846
  %v773 = vmul.f32 %v769, 0.7978846
  %v774 = vmul.f32 %v770, 0.7978846
  %v775 = vtanh.pop %v771
  %v776 = vtanh.pop %v772
  %v777 = vtanh.pop %v773
  %v778 = vtanh.pop %v774
  %v779 = vadd.f32 %v775, 1.0
  %v780 = vadd.f32 %v776, 1.0
  %v781 = vadd.f32 %v777, 1.0
  %v782 = vadd.f32 %v778, 1.0
  %v783 = vmul.f32 %v751, %v779
  %v784 = vmul.f32 %v752, %v780
  %v785 = vmul.f32 %v753, %v781
  %v786 = vmul.f32 %v754, %v782
  %v787 = vld [vmem:[%s1 + $0xc0] sm:$0xff]
  %v788 = vld [vmem:[%s1 + $0xc8] sm:$0xff]
  %790 = vset.pattern.permute.xlu0 5
  %791 = vperm.xlu0 %790, %v788
  %v792 = vpop.permute.xlu0 %791
  %v795 = vsel %vm43, %v787, 0
  %797 = vmatprep.subr.mxu0 0.0
  %798 = vmatpush1.msra.mxu0 %v783
  %799 = vmatprep.subr.mxu0 0.0
  %800 = vmatpush1.msra.mxu0 %v784
  %801 = vmatprep.subr.mxu0 0.0
  %802 = vmatpush1.msra.mxu0 %v785
  %803 = vmatprep.subr.mxu0 0.0
  %804 = vmatpush1.msra.mxu0 %v786
  %805 = vmatprep.subr.mxu0 0.0
  %806 = vmatpush1.msra.mxu0 0.0
  %807 = vmatprep.subr.mxu0 0.0
  %808 = vmatpush1.msra.mxu0 0.0
  %809 = vmatprep.subr.mxu0 0.0
  %810 = vmatpush1.msra.mxu0 0.0
  %811 = vmatprep.subr.mxu0 0.0
  %812 = vmatpush1.msra.mxu0 0.0
  %813 = vmatprep.subr.mxu0 0.0
  %814 = vmatpush1.msra.mxu0 0.0
  %815 = vmatprep.subr.mxu0 0.0
  %816 = vmatpush1.msra.mxu0 0.0
  %817 = vmatprep.subr.mxu0 0.0
  %818 = vmatpush1.msra.mxu0 0.0
  %819 = vmatprep.subr.mxu0 0.0
  %820 = vmatpush1.msra.mxu0 0.0
  %821 = vmatprep.subr.mxu0 0.0
  %822 = vmatpush1.msra.mxu0 0.0
  %823 = vmatprep.subr.mxu0 0.0
  %824 = vmatpush1.msra.mxu0 0.0
  %825 = vmatprep.subr.mxu0 0.0
  %826 = vmatpush1.msra.mxu0 0.0
  %827 = vmatprep.subr.mxu0 0.0
  %828 = vmatpush1.msra.mxu0 0.0
  %829 = vmatprep.subr.mxu0 0.0
  %830 = vmatpush1.msra.mxu0 0.0
  %831 = vmatprep.subr.mxu0 0.0
  %832 = vmatpush1.msra.mxu0 0.0
  %833 = vmatprep.subr.mxu0 0.0
  %834 = vmatpush1.msra.mxu0 0.0
  %835 = vmatprep.subr.mxu0 0.0
  %836 = vmatpush1.msra.mxu0 0.0
  %837 = vmatprep.subr.mxu0 0.0
  %838 = vmatpush1.msra.mxu0 0.0
  %839 = vmatprep.subr.mxu0 0.0
  %840 = vmatpush1.msra.mxu0 0.0
  %841 = vmatprep.subr.mxu0 0.0
  %842 = vmatpush1.msra.mxu0 0.0
  %843 = vmatprep.subr.mxu0 0.0
  %844 = vmatpush1.msra.mxu0 0.0
  %845 = vmatprep.subr.mxu0 0.0
  %846 = vmatpush1.msra.mxu0 0.0
  %847 = vmatprep.subr.mxu0 0.0
  %848 = vmatpush1.msra.mxu0 0.0
  %849 = vmatprep.subr.mxu0 0.0
  %850 = vmatpush1.msra.mxu0 0.0
  %851 = vmatprep.subr.mxu0 0.0
  %852 = vmatpush1.msra.mxu0 0.0
  %853 = vmatprep.subr.mxu0 0.0
  %854 = vmatpush1.msra.mxu0 0.0
  %855 = vmatprep.subr.mxu0 0.0
  %856 = vmatpush1.msra.mxu0 0.0
  %857 = vmatprep.subr.mxu0 0.0
  %858 = vmatpush1.msra.mxu0 0.0
  %859 = vmatprep.subr.mxu0 0.0
  %860 = vmatpush1.msra.mxu0 0.0
  %861 = vmatprep.mubr.f32.mxu0 0.0
  %862 = vmatmul.mubr.f32.gmra.mrb[0].mxu0 %v795
  %v863 = vpop.f32.mrb[0].mxu0
  %v864 = vadd.f32 %v792, %v863
  %v865 = vpop.f32.mrb[0].mxu0
  %866 = vdwg.mxu0
  %v867 = vlaneseq
  %v868 = vshrl.u32 %v867, 7
  %vm869 = vcmp.lt.s32.totalorder %v868, 4
  %v870 = vsel %vm869, %v864, -1e+30
  %v871 = vrot.slane %v870, 4
  %v872 = vmax.f32 %v870, %v871
  %v873 = vrot.slane %v872, 2
  %v874 = vmax.f32 %v872, %v873
  %v875 = vrot.slane %v874, 1
  %v876 = vmax.f32 %v874, %v875
  %v877 = vsub.f32 %v870, %v876
  %v878 = vmul.f32 %v877, 1.442695
  %v879 = vpow.pop %v878
  %v880 = vrot.slane %v879, 4
  %v881 = vadd.f32 %v879, %v880
  %v882 = vrot.slane %v881, 2
  %v883 = vadd.f32 %v881, %v882
  %v884 = vrot.slane %v883, 1
  %v885 = vadd.f32 %v883, %v884
  %v886 = vrcp.pop %v885
  %v887 = vmul.f32 %v879, %v886
  %888 = vst [vmem:[%s2] sm:$0xff] %v262
  %889 = vst [vmem:[%s2 + $0x8] sm:$0xff] %v263
  %890 = vst [vmem:[%s2 + $0x10] sm:$0xff] %v264
  %891 = vst [vmem:[%s2 + $0x18] sm:$0xff] %v265
  %892 = vst [vmem:[%s2 + $0x20] sm:$0xff] %v887
  %893 = vst [vmem:[%s2 + $0x28] sm:$0xff] %v430
  // Predicated region
  $region10: #{model_forward.1} parent=0 // pred_check
    _
  $region11: #{model_forward.1} parent=0 // pred_check_branch
    %895 = sbr.rel (0) target = $region13
  $region12: #{model_forward.1} parent=0 // pred_region
    _
  $region13: #{model_forward.1} parent=0 // pred_fallthru
    _
  // Predicated region
  $region14: #{model_forward.1} parent=0 // pred_check
    _
  $region15: #{model_forward.1} parent=0 // pred_check_branch
    %897 = sbr.rel (0) target = $region17
  $region16: #{model_forward.1} parent=0 // pred_region
    _
  $region17: #{model_forward.1} parent=0 // pred_fallthru
    _

</llo_original>
